<compile_context>
chip_gen: v6e
topology: v6e:2x2x1
jax: 0.10.0
libtpu: 0.0.40
codegen_flags: <defaults>
</compile_context>

<pallas_src>
import jax
import jax.numpy as jnp
from jax.experimental import pallas as pl
from jax.experimental.pallas import tpu as pltpu


def _round_up(n, m):
    return ((n + m - 1) // m) * m


def nest_mlp_kernel(x_ref, w1_ref, b1_ref, w2_ref, b2_ref, w3_ref, b3_ref, o_ref):
    # hidden1 = relu(x @ W1 + b1)
    h1 = jnp.dot(x_ref[...], w1_ref[...], preferred_element_type=jnp.float32)
    h1 = jnp.maximum(h1 + b1_ref[...], 0.0)
    # hidden2 = relu(h1 @ W2 + b2)
    h2 = jnp.dot(h1, w2_ref[...], preferred_element_type=jnp.float32)
    h2 = jnp.maximum(h2 + b2_ref[...], 0.0)
    # out = h2 @ W3 + b3   (no activation, matches self.linear)
    out = jnp.dot(h2, w3_ref[...], preferred_element_type=jnp.float32)
    o_ref[...] = (out + b3_ref[...]).astype(o_ref.dtype)


def nest_mlp_pallas(x, w1, b1, w2, b2, w3, b3, *, block_rows=4096):
    B, in_dim = x.shape
    out_dim = w3.shape[1]  # 16

    # Batch tile: multiple of 8 (sublane rule), capped at block_rows.  No
    # wrapper-side padding of x: grid = cdiv(B, tm) and Pallas clips the
    # trailing block's stores (rows are independent, so garbage padding rows
    # never contaminate real rows).
    # v7x note: for very large B, grid >= 2 keeps both TensorCores busy via
    # the "parallel" axis; at these toy sizes grid == 1 is fine.
    tm = min(block_rows, _round_up(B, 8))
    grid = (pl.cdiv(B, tm),)

    flops = 2 * B * (20 * 64 + 64 * 32 + 32 * 16)
    bytes_accessed = (
        B * (in_dim + out_dim) * 4
        + (w1.size + b1.size + w2.size + b2.size + w3.size + b3.size) * 4
    )

    return pl.pallas_call(
        nest_mlp_kernel,
        out_shape=jax.ShapeDtypeStruct((B, out_dim), jnp.float32),
        grid_spec=pltpu.PrefetchScalarGridSpec(
            num_scalar_prefetch=0,
            grid=grid,
            in_specs=[
                # x: tiled over batch (double-buffered by the pipeline).
                # TODO(synk): if a v5e trace shows the writeback DMA exposed,
                # add pipeline_mode=pl.Buffered(3) here and on out_specs.
                pl.BlockSpec((tm, in_dim), lambda i: (i, 0)),
                pl.BlockSpec(w1.shape, lambda i: (0, 0)),   # weights/biases stay
                pl.BlockSpec(b1.shape, lambda i: (0, 0)),   # VMEM-resident across
                pl.BlockSpec(w2.shape, lambda i: (0, 0)),   # all grid steps
                pl.BlockSpec(b2.shape, lambda i: (0, 0)),
                pl.BlockSpec(w3.shape, lambda i: (0, 0)),
                pl.BlockSpec(b3.shape, lambda i: (0, 0)),
            ],
            out_specs=pl.BlockSpec((tm, out_dim), lambda i: (i, 0)),
        ),
        compiler_params=pltpu.CompilerParams(
            # Independent batch tiles: shards grid steps across both TCs on
            # v7x, no-op on v5e/v6e.
            dimension_semantics=("parallel",),
            # Covers the ~12-14 MiB per-step VMEM need at tm=4096 on v5e's
            # 16 MiB scoped default; already the default on v6e/v7x.
            vmem_limit_bytes=32 * 1024 * 1024,
        ),
        cost_estimate=pl.CostEstimate(
            flops=flops, transcendentals=0, bytes_accessed=bytes_accessed
        ),
    )(x, w1, b1, w2, b2, w3, b3)


def nest_mlp_reference(x, w1, b1, w2, b2, w3, b3):
    h = jnp.maximum(x @ w1 + b1, 0.0)
    h = jnp.maximum(h @ w2 + b2, 0.0)
    return h @ w3 + b3


def init_params(key):
    """Deterministic param init matching PyTorch Linear shapes (stored transposed)."""
    ks = jax.random.split(key, 6)

    def linear(kw, kb, fan_in, fan_out):
        bound = 1.0 / jnp.sqrt(fan_in)
        w = jax.random.uniform(kw, (fan_in, fan_out), jnp.float32, -bound, bound)
        b = jax.random.uniform(kb, (1, fan_out), jnp.float32, -bound, bound)
        return w, b

    w1, b1 = linear(ks[0], ks[1], 20, 64)
    w2, b2 = linear(ks[2], ks[3], 64, 32)
    w3, b3 = linear(ks[4], ks[5], 32, 16)
    return w1, b1, w2, b2, w3, b3


if __name__ == "__main__":
    key = jax.random.PRNGKey(0)
    kx, kx2, kp = jax.random.split(key, 3)
    params = init_params(kp)

    # X = torch.rand(2, 20) analogue (single ragged block: tm=8 > B=2,
    # out-of-bounds rows computed but clipped on store).
    x = jax.random.uniform(kx, (2, 20), jnp.float32)
    out = jax.block_until_ready(nest_mlp_pallas(x, *params))
    assert out.shape == (2, 16), out.shape
    ref = nest_mlp_reference(x, *params)
    assert jnp.allclose(out, ref, atol=1e-5, rtol=1e-5)

    # Larger, non-multiple-of-8 batch to exercise batch tiling / ragged
    # trailing-block clipping without any wrapper-side padding.
    xb = jax.random.uniform(kx2, (1000, 20), jnp.float32)
    outb = jax.block_until_ready(nest_mlp_pallas(xb, *params))
    assert outb.shape == (1000, 16), outb.shape
    refb = nest_mlp_reference(xb, *params)
    assert jnp.allclose(outb, refb, atol=1e-4, rtol=1e-4)

    print("KERNEL_OK")
</pallas_src>

<mosaic_0001>
module attributes {stable_mosaic.version = 11 : i64} {
  func.func @nest_mlp_kernel(%arg0: i32, %arg1: memref<8x20xf32, #tpu.memory_space<vmem>>, %arg2: memref<20x64xf32, #tpu.memory_space<vmem>>, %arg3: memref<1x64xf32, #tpu.memory_space<vmem>>, %arg4: memref<64x32xf32, #tpu.memory_space<vmem>>, %arg5: memref<1x32xf32, #tpu.memory_space<vmem>>, %arg6: memref<32x16xf32, #tpu.memory_space<vmem>>, %arg7: memref<1x16xf32, #tpu.memory_space<vmem>>, %arg8: memref<8x16xf32, #tpu.memory_space<vmem>>) attributes {dimension_semantics = [#tpu.dimension_semantics<parallel>], iteration_bounds = array<i64: 1>, scalar_prefetch = 0 : i64, scratch_operands = 0 : i64, tpu.core_type = #tpu.core_type<tc>, window_params = [{transform_indices = @transform_0, window_bounds = array<i64: 8, 20>}, {pipeline_mode = #tpu.pipeline_mode<synchronous>, transform_indices = @transform_1, window_bounds = array<i64: 20, 64>}, {pipeline_mode = #tpu.pipeline_mode<synchronous>, transform_indices = @transform_2, window_bounds = array<i64: 1, 64>}, {pipeline_mode = #tpu.pipeline_mode<synchronous>, transform_indices = @transform_3, window_bounds = array<i64: 64, 32>}, {pipeline_mode = #tpu.pipeline_mode<synchronous>, transform_indices = @transform_4, window_bounds = array<i64: 1, 32>}, {pipeline_mode = #tpu.pipeline_mode<synchronous>, transform_indices = @transform_5, window_bounds = array<i64: 32, 16>}, {pipeline_mode = #tpu.pipeline_mode<synchronous>, transform_indices = @transform_6, window_bounds = array<i64: 1, 16>}, {transform_indices = @transform_7, window_bounds = array<i64: 8, 16>}]} {
    %c0 = arith.constant 0 : index
    %c0_0 = arith.constant 0 : index
    %0 = vector.load %arg1[%c0, %c0_0] : memref<8x20xf32, #tpu.memory_space<vmem>>, vector<8x20xf32>
    %c0_1 = arith.constant 0 : index
    %c0_2 = arith.constant 0 : index
    %1 = vector.load %arg2[%c0_1, %c0_2] : memref<20x64xf32, #tpu.memory_space<vmem>>, vector<20x64xf32>
    %cst = arith.constant dense<0.000000e+00> : vector<8x64xf32>
    %2 = tpu.matmul %0, %1, %cst {dimension_numbers = #tpu.dot_dimension_numbers<[1], [0], [0], [1], [0, 0, 1, 1], [], []>} : vector<8x20xf32>, vector<20x64xf32>, vector<8x64xf32> -> vector<8x64xf32>
    %c0_3 = arith.constant 0 : index
    %c0_4 = arith.constant 0 : index
    %3 = vector.load %arg3[%c0_3, %c0_4] : memref<1x64xf32, #tpu.memory_space<vmem>>, vector<1x64xf32>
    %4 = vector.broadcast %3 : vector<1x64xf32> to vector<8x64xf32>
    %5 = arith.addf %2, %4 : vector<8x64xf32>
    %cst_5 = arith.constant 0.000000e+00 : f32
    %6 = vector.broadcast %cst_5 : f32 to vector<8x64xf32>
    %7 = arith.maximumf %5, %6 : vector<8x64xf32>
    %c0_6 = arith.constant 0 : index
    %c0_7 = arith.constant 0 : index
    %8 = vector.load %arg4[%c0_6, %c0_7] : memref<64x32xf32, #tpu.memory_space<vmem>>, vector<64x32xf32>
    %cst_8 = arith.constant dense<0.000000e+00> : vector<8x32xf32>
    %9 = tpu.matmul %7, %8, %cst_8 {dimension_numbers = #tpu.dot_dimension_numbers<[1], [0], [0], [1], [0, 0, 1, 1], [], []>} : vector<8x64xf32>, vector<64x32xf32>, vector<8x32xf32> -> vector<8x32xf32>
    %c0_9 = arith.constant 0 : index
    %c0_10 = arith.constant 0 : index
    %10 = vector.load %arg5[%c0_9, %c0_10] : memref<1x32xf32, #tpu.memory_space<vmem>>, vector<1x32xf32>
    %11 = vector.broadcast %10 : vector<1x32xf32> to vector<8x32xf32>
    %12 = arith.addf %9, %11 : vector<8x32xf32>
    %cst_11 = arith.constant 0.000000e+00 : f32
    %13 = vector.broadcast %cst_11 : f32 to vector<8x32xf32>
    %14 = arith.maximumf %12, %13 : vector<8x32xf32>
    %c0_12 = arith.constant 0 : index
    %c0_13 = arith.constant 0 : index
    %15 = vector.load %arg6[%c0_12, %c0_13] : memref<32x16xf32, #tpu.memory_space<vmem>>, vector<32x16xf32>
    %cst_14 = arith.constant dense<0.000000e+00> : vector<8x16xf32>
    %16 = tpu.matmul %14, %15, %cst_14 {dimension_numbers = #tpu.dot_dimension_numbers<[1], [0], [0], [1], [0, 0, 1, 1], [], []>} : vector<8x32xf32>, vector<32x16xf32>, vector<8x16xf32> -> vector<8x16xf32>
    %c0_15 = arith.constant 0 : index
    %c0_16 = arith.constant 0 : index
    %17 = vector.load %arg7[%c0_15, %c0_16] : memref<1x16xf32, #tpu.memory_space<vmem>>, vector<1x16xf32>
    %18 = vector.broadcast %17 : vector<1x16xf32> to vector<8x16xf32>
    %19 = arith.addf %16, %18 : vector<8x16xf32>
    %c0_17 = arith.constant 0 : index
    %c0_18 = arith.constant 0 : index
    %20 = vector.load %arg8[%c0_17, %c0_18] : memref<8x16xf32, #tpu.memory_space<vmem>>, vector<8x16xf32>
    tpu.vector_store %arg8[%c0_17, %c0_18], %19 {strides = array<i32>} : memref<8x16xf32, #tpu.memory_space<vmem>>, vector<8x16xf32>,
    return
  }
  func.func @transform_0(%arg0: i32) -> (i32, i32) {
    %c0_i32 = arith.constant 0 : i32
    %c0_i32_0 = arith.constant 0 : i32
    return %arg0, %c0_i32 : i32, i32
  }
  func.func @transform_1(%arg0: i32) -> (i32, i32) {
    %c0_i32 = arith.constant 0 : i32
    %c0_i32_0 = arith.constant 0 : i32
    %c0_i32_1 = arith.constant 0 : i32
    return %c0_i32, %c0_i32_0 : i32, i32
  }
  func.func @transform_2(%arg0: i32) -> (i32, i32) {
    %c0_i32 = arith.constant 0 : i32
    %c0_i32_0 = arith.constant 0 : i32
    %c0_i32_1 = arith.constant 0 : i32
    return %c0_i32, %c0_i32_0 : i32, i32
  }
  func.func @transform_3(%arg0: i32) -> (i32, i32) {
    %c0_i32 = arith.constant 0 : i32
    %c0_i32_0 = arith.constant 0 : i32
    %c0_i32_1 = arith.constant 0 : i32
    return %c0_i32, %c0_i32_0 : i32, i32
  }
  func.func @transform_4(%arg0: i32) -> (i32, i32) {
    %c0_i32 = arith.constant 0 : i32
    %c0_i32_0 = arith.constant 0 : i32
    %c0_i32_1 = arith.constant 0 : i32
    return %c0_i32, %c0_i32_0 : i32, i32
  }
  func.func @transform_5(%arg0: i32) -> (i32, i32) {
    %c0_i32 = arith.constant 0 : i32
    %c0_i32_0 = arith.constant 0 : i32
    %c0_i32_1 = arith.constant 0 : i32
    return %c0_i32, %c0_i32_0 : i32, i32
  }
  func.func @transform_6(%arg0: i32) -> (i32, i32) {
    %c0_i32 = arith.constant 0 : i32
    %c0_i32_0 = arith.constant 0 : i32
    %c0_i32_1 = arith.constant 0 : i32
    return %c0_i32, %c0_i32_0 : i32, i32
  }
  func.func @transform_7(%arg0: i32) -> (i32, i32) {
    %c0_i32 = arith.constant 0 : i32
    %c0_i32_0 = arith.constant 0 : i32
    return %arg0, %c0_i32 : i32, i32
  }
}

</mosaic_0001>

<llo_original>
// kernel: tpu_custom_call.1
$region0: #{tpu_custom_call.1}
  #allocation0 [shape = 'u32[]', space=smem, size = 0x4, offset = 0x4, fixed_abs, tag = 'smem constant byte address 0x4 - core index']
  #allocation1 [shape = 'u32[144,128]{1,0:T(1,128)}', space=vmem, size = 0x12000, scoped, tag = 'internal scratch']
  %s0 = inlined_call_operand.vmem [shape: f32[2,20], index: 0, kind: input, shape index: {}]
  %s1 = inlined_call_operand.vmem [shape: f32[20,64], index: 1, kind: input, shape index: {}]
  %s2 = inlined_call_operand.vmem [shape: f32[1,64], index: 2, kind: input, shape index: {}]
  %s3 = inlined_call_operand.vmem [shape: f32[64,32], index: 3, kind: input, shape index: {}]
  %s4 = inlined_call_operand.vmem [shape: f32[1,32], index: 4, kind: input, shape index: {}]
  %s5 = inlined_call_operand.vmem [shape: f32[32,16], index: 5, kind: input, shape index: {}]
  %s6 = inlined_call_operand.vmem [shape: f32[1,16], index: 6, kind: input, shape index: {}]
  %s7 = inlined_call_operand.hbm [shape: f32[2,16], index: 7, kind: output, shape index: {}]
  %s8 = sld [smem:[#allocation0]]
  $region38: #{tpu_custom_call.1} parent=0
    _
  %s10 = ssub.s32 1, %s8
  %s11 = scalar_select 0, %s10, %s8
  $region1: #{tpu_custom_call.1} parent=0
    #allocation2 [shape = 'u8[4096]{0}', space=vmem, size = 0x1000, scoped, tag = 'output window, operand 0, single buffered']
    #allocation3 [shape = 's32[1]{0}', space=sflag, size = 0x4, scoped, tag = 'scoped memory for tpu_custom_call.1']
    %12 = vsyncpa [#allocation3], 0
    // Predicated region
    $region2: #{tpu_custom_call.1} parent=1 // pred_check
      _
    $region3: #{tpu_custom_call.1} parent=1 // pred_check_branch
      %14 = sbr.rel (0) target = $region5
    $region4: #{tpu_custom_call.1} parent=1 // pred_region
      _
    $region5: #{tpu_custom_call.1} parent=1 // pred_fallthru
      _
    // Predicated region
    $region6: #{tpu_custom_call.1} parent=1 // pred_check
      _
    $region7: #{tpu_custom_call.1} parent=1 // pred_check_branch
      %16 = sbr.rel (0) target = $region9
    $region8: #{tpu_custom_call.1} parent=1 // pred_region
      _
    $region9: #{tpu_custom_call.1} parent=1 // pred_fallthru
      _
    // Predicated region
    $region10: #{tpu_custom_call.1} parent=1 // pred_check
      _
    $region11: #{tpu_custom_call.1} parent=1 // pred_check_branch
      %18 = sbr.rel (0) target = $region13
    $region12: #{tpu_custom_call.1} parent=1 // pred_region
      _
    $region13: #{tpu_custom_call.1} parent=1 // pred_fallthru
      _
    // Predicated region
    $region14: #{tpu_custom_call.1} parent=1 // pred_check
      _
    $region15: #{tpu_custom_call.1} parent=1 // pred_check_branch
      %20 = sbr.rel (0) target = $region17
    $region16: #{tpu_custom_call.1} parent=1 // pred_region
      _
    $region17: #{tpu_custom_call.1} parent=1 // pred_fallthru
      _
    // Predicated region
    $region18: #{tpu_custom_call.1} parent=1 // pred_check
      _
    $region19: #{tpu_custom_call.1} parent=1 // pred_check_branch
      %22 = sbr.rel (0) target = $region21
    $region20: #{tpu_custom_call.1} parent=1 // pred_region
      _
    $region21: #{tpu_custom_call.1} parent=1 // pred_fallthru
      _
    // Predicated region
    $region22: #{tpu_custom_call.1} parent=1 // pred_check
      _
    $region23: #{tpu_custom_call.1} parent=1 // pred_check_branch
      %24 = sbr.rel (0) target = $region25
    $region24: #{tpu_custom_call.1} parent=1 // pred_region
      _
    $region25: #{tpu_custom_call.1} parent=1 // pred_fallthru
      _
    // Predicated region
    $region26: #{tpu_custom_call.1} parent=1 // pred_check
      _
    $region27: #{tpu_custom_call.1} parent=1 // pred_check_branch
      %26 = sbr.rel (0) target = $region29
    $region28: #{tpu_custom_call.1} parent=1 // pred_region
      _
    $region29: #{tpu_custom_call.1} parent=1 // pred_fallthru
      _
    %v27 = vld [vmem:[%s0] sm:$0xff]
    %v28 = vld [vmem:[%s1] sm:$0xff]
    %v29 = vld [vmem:[%s1 + $0x8] sm:$0xff]
    %v30 = vld [vmem:[%s1 + $0x10] sm:$0xf]
    %v31 = vld [vmem:[%s2] sm:$0x1]
    %v33 = vlaneseq
    %v34 = vshrl.u32 %v33, 7
    %v35 = vsub.s32 0, %v34
    %v36 = vrot.slane %v31, %v35
    %vm38 = vcmask 162816
    %v40 = vsel %vm38, %v27, 0
    %vm42 = vcmask 1043456
    %v44 = vsel %vm42, %v30, 0
    %46 = vmatprep.subr.mxu0 0.0
    %47 = vmatpush1.msra.mxu0 0.0
    %48 = vmatprep.subr.mxu0 0.0
    %49 = vmatpush1.msra.mxu0 0.0
    %50 = vmatprep.subr.mxu0 0.0
    %51 = vmatpush1.msra.mxu0 0.0
    %52 = vmatprep.subr.mxu0 0.0
    %53 = vmatpush1.msra.mxu0 0.0
    %54 = vmatprep.subr.mxu0 0.0
    %55 = vmatpush1.msra.mxu0 0.0
    %56 = vmatprep.subr.mxu0 0.0
    %57 = vmatpush1.msra.mxu0 0.0
    %58 = vmatprep.subr.mxu0 0.0
    %59 = vmatpush1.msra.mxu0 0.0
    %60 = vmatprep.subr.mxu0 0.0
    %61 = vmatpush1.msra.mxu0 0.0
    %62 = vmatprep.subr.mxu0 0.0
    %63 = vmatpush1.msra.mxu0 0.0
    %64 = vmatprep.subr.mxu0 0.0
    %65 = vmatpush1.msra.mxu0 0.0
    %66 = vmatprep.subr.mxu0 0.0
    %67 = vmatpush1.msra.mxu0 0.0
    %68 = vmatprep.subr.mxu0 0.0
    %69 = vmatpush1.msra.mxu0 0.0
    %70 = vmatprep.subr.mxu0 0.0
    %71 = vmatpush1.msra.mxu0 0.0
    %72 = vmatprep.subr.mxu0 0.0
    %73 = vmatpush1.msra.mxu0 %v44
    %74 = vmatprep.subr.mxu0 0.0
    %75 = vmatpush1.msra.mxu0 %v29
    %76 = vmatprep.subr.mxu0 0.0
    %77 = vmatpush1.msra.mxu0 %v28
    %78 = vmatprep.subr.mxu0 0.0
    %79 = vmatpush2.msra.mxu0 0.0
    %80 = vmatprep.subr.mxu0 0.0
    %81 = vmatpush2.msra.mxu0 0.0
    %82 = vmatprep.subr.mxu0 0.0
    %83 = vmatpush2.msra.mxu0 0.0
    %84 = vmatprep.subr.mxu0 0.0
    %85 = vmatpush2.msra.mxu0 0.0
    %86 = vmatprep.subr.mxu0 0.0
    %87 = vmatpush2.msra.mxu0 0.0
    %88 = vmatprep.subr.mxu0 0.0
    %89 = vmatpush2.msra.mxu0 0.0
    %90 = vmatprep.subr.mxu0 0.0
    %91 = vmatpush2.msra.mxu0 0.0
    %92 = vmatprep.subr.mxu0 0.0
    %93 = vmatpush2.msra.mxu0 0.0
    %94 = vmatprep.subr.mxu0 0.0
    %95 = vmatpush2.msra.mxu0 0.0
    %96 = vmatprep.subr.mxu0 0.0
    %97 = vmatpush2.msra.mxu0 0.0
    %98 = vmatprep.subr.mxu0 0.0
    %99 = vmatpush2.msra.mxu0 0.0
    %100 = vmatprep.subr.mxu0 0.0
    %101 = vmatpush2.msra.mxu0 0.0
    %102 = vmatprep.subr.mxu0 0.0
    %103 = vmatpush2.msra.mxu0 0.0
    %104 = vmatprep.subr.mxu0 0.0
    %105 = vmatpush2.msra.mxu0 0.0
    %106 = vmatprep.subr.mxu0 0.0
    %107 = vmatpush2.msra.mxu0 0.0
    %108 = vmatprep.subr.mxu0 0.0
    %109 = vmatpush2.msra.mxu0 0.0
    %110 = vmatprep.mubr.f32.mxu0 0.0
    %111 = vmatmul.mubr.f32.gmra.mxu0 %v40
    %v112 = vpop.f32.mrf.mxu0
    %v113 = vadd.f32 %v36, %v112
    %v114 = vpop.f32.mrf.mxu0
    %115 = vdwg.mxu0
    %v116 = vmax.f32 %v113, 0.0
    %v117 = vld [vmem:[%s3] sm:$0xff]
    %v118 = vld [vmem:[%s3 + $0x8] sm:$0xff]
    %v119 = vld [vmem:[%s3 + $0x10] sm:$0xff]
    %v120 = vld [vmem:[%s3 + $0x18] sm:$0xff]
    %v121 = vld [vmem:[%s3 + $0x20] sm:$0xff]
    %v122 = vld [vmem:[%s3 + $0x28] sm:$0xff]
    %v123 = vld [vmem:[%s3 + $0x30] sm:$0xff]
    %v124 = vld [vmem:[%s3 + $0x38] sm:$0xff]
    %v125 = vld [vmem:[%s4] sm:$0x1]
    %v127 = vlaneseq
    %v128 = vshrl.u32 %v127, 7
    %v129 = vsub.s32 0, %v128
    %v130 = vrot.slane %v125, %v129
    %vm132 = vcmask 523264
    %v134 = vsel %vm132, %v116, 0
    %136 = vmatprep.subr.mxu0 0.0
    %137 = vmatpush1.msra.mxu0 0.0
    %138 = vmatprep.subr.mxu0 0.0
    %139 = vmatpush1.msra.mxu0 0.0
    %140 = vmatprep.subr.mxu0 0.0
    %141 = vmatpush1.msra.mxu0 0.0
    %142 = vmatprep.subr.mxu0 0.0
    %143 = vmatpush1.msra.mxu0 0.0
    %144 = vmatprep.subr.mxu0 0.0
    %145 = vmatpush1.msra.mxu0 0.0
    %146 = vmatprep.subr.mxu0 0.0
    %147 = vmatpush1.msra.mxu0 0.0
    %148 = vmatprep.subr.mxu0 0.0
    %149 = vmatpush1.msra.mxu0 0.0
    %150 = vmatprep.subr.mxu0 0.0
    %151 = vmatpush1.msra.mxu0 0.0
    %152 = vmatprep.subr.mxu0 0.0
    %153 = vmatpush1.msra.mxu0 %v124
    %154 = vmatprep.subr.mxu0 0.0
    %155 = vmatpush1.msra.mxu0 %v123
    %156 = vmatprep.subr.mxu0 0.0
    %157 = vmatpush1.msra.mxu0 %v122
    %158 = vmatprep.subr.mxu0 0.0
    %159 = vmatpush1.msra.mxu0 %v121
    %160 = vmatprep.subr.mxu0 0.0
    %161 = vmatpush1.msra.mxu0 %v120
    %162 = vmatprep.subr.mxu0 0.0
    %163 = vmatpush1.msra.mxu0 %v119
    %164 = vmatprep.subr.mxu0 0.0
    %165 = vmatpush1.msra.mxu0 %v118
    %166 = vmatprep.subr.mxu0 0.0
    %167 = vmatpush1.msra.mxu0 %v117
    %168 = vmatprep.subr.mxu0 0.0
    %169 = vmatpush2.msra.mxu0 0.0
    %170 = vmatprep.subr.mxu0 0.0
    %171 = vmatpush2.msra.mxu0 0.0
    %172 = vmatprep.subr.mxu0 0.0
    %173 = vmatpush2.msra.mxu0 0.0
    %174 = vmatprep.subr.mxu0 0.0
    %175 = vmatpush2.msra.mxu0 0.0
    %176 = vmatprep.subr.mxu0 0.0
    %177 = vmatpush2.msra.mxu0 0.0
    %178 = vmatprep.subr.mxu0 0.0
    %179 = vmatpush2.msra.mxu0 0.0
    %180 = vmatprep.subr.mxu0 0.0
    %181 = vmatpush2.msra.mxu0 0.0
    %182 = vmatprep.subr.mxu0 0.0
    %183 = vmatpush2.msra.mxu0 0.0
    %184 = vmatprep.subr.mxu0 0.0
    %185 = vmatpush2.msra.mxu0 0.0
    %186 = vmatprep.subr.mxu0 0.0
    %187 = vmatpush2.msra.mxu0 0.0
    %188 = vmatprep.subr.mxu0 0.0
    %189 = vmatpush2.msra.mxu0 0.0
    %190 = vmatprep.subr.mxu0 0.0
    %191 = vmatpush2.msra.mxu0 0.0
    %192 = vmatprep.subr.mxu0 0.0
    %193 = vmatpush2.msra.mxu0 0.0
    %194 = vmatprep.subr.mxu0 0.0
    %195 = vmatpush2.msra.mxu0 0.0
    %196 = vmatprep.subr.mxu0 0.0
    %197 = vmatpush2.msra.mxu0 0.0
    %198 = vmatprep.subr.mxu0 0.0
    %199 = vmatpush2.msra.mxu0 0.0
    %200 = vmatprep.mubr.f32.mxu0 0.0
    %201 = vmatmul.mubr.f32.gmra.mxu0 %v134
    %v202 = vpop.f32.mrf.mxu0
    %v203 = vadd.f32 %v130, %v202
    %v204 = vpop.f32.mrf.mxu0
    %205 = vdwg.mxu0
    %v206 = vmax.f32 %v203, 0.0
    %v207 = vld [vmem:[%s5] sm:$0xff]
    %v208 = vld [vmem:[%s5 + $0x8] sm:$0xff]
    %v209 = vld [vmem:[%s5 + $0x10] sm:$0xff]
    %v210 = vld [vmem:[%s5 + $0x18] sm:$0xff]
    %v211 = vld [vmem:[%s6] sm:$0x1]
    %v213 = vlaneseq
    %v214 = vshrl.u32 %v213, 7
    %v215 = vsub.s32 0, %v214
    %v216 = vrot.slane %v211, %v215
    %vm218 = vcmask 261120
    %v220 = vsel %vm218, %v206, 0
    %222 = vmatprep.subr.mxu0 0.0
    %223 = vmatpush1.msra.mxu0 0.0
    %224 = vmatprep.subr.mxu0 0.0
    %225 = vmatpush1.msra.mxu0 0.0
    %226 = vmatprep.subr.mxu0 0.0
    %227 = vmatpush1.msra.mxu0 0.0
    %228 = vmatprep.subr.mxu0 0.0
    %229 = vmatpush1.msra.mxu0 0.0
    %230 = vmatprep.subr.mxu0 0.0
    %231 = vmatpush1.msra.mxu0 0.0
    %232 = vmatprep.subr.mxu0 0.0
    %233 = vmatpush1.msra.mxu0 0.0
    %234 = vmatprep.subr.mxu0 0.0
    %235 = vmatpush1.msra.mxu0 0.0
    %236 = vmatprep.subr.mxu0 0.0
    %237 = vmatpush1.msra.mxu0 0.0
    %238 = vmatprep.subr.mxu0 0.0
    %239 = vmatpush1.msra.mxu0 0.0
    %240 = vmatprep.subr.mxu0 0.0
    %241 = vmatpush1.msra.mxu0 0.0
    %242 = vmatprep.subr.mxu0 0.0
    %243 = vmatpush1.msra.mxu0 0.0
    %244 = vmatprep.subr.mxu0 0.0
    %245 = vmatpush1.msra.mxu0 0.0
    %246 = vmatprep.subr.mxu0 0.0
    %247 = vmatpush1.msra.mxu0 %v210
    %248 = vmatprep.subr.mxu0 0.0
    %249 = vmatpush1.msra.mxu0 %v209
    %250 = vmatprep.subr.mxu0 0.0
    %251 = vmatpush1.msra.mxu0 %v208
    %252 = vmatprep.subr.mxu0 0.0
    %253 = vmatpush1.msra.mxu0 %v207
    %254 = vmatprep.subr.mxu0 0.0
    %255 = vmatpush2.msra.mxu0 0.0
    %256 = vmatprep.subr.mxu0 0.0
    %257 = vmatpush2.msra.mxu0 0.0
    %258 = vmatprep.subr.mxu0 0.0
    %259 = vmatpush2.msra.mxu0 0.0
    %260 = vmatprep.subr.mxu0 0.0
    %261 = vmatpush2.msra.mxu0 0.0
    %262 = vmatprep.subr.mxu0 0.0
    %263 = vmatpush2.msra.mxu0 0.0
    %264 = vmatprep.subr.mxu0 0.0
    %265 = vmatpush2.msra.mxu0 0.0
    %266 = vmatprep.subr.mxu0 0.0
    %267 = vmatpush2.msra.mxu0 0.0
    %268 = vmatprep.subr.mxu0 0.0
    %269 = vmatpush2.msra.mxu0 0.0
    %270 = vmatprep.subr.mxu0 0.0
    %271 = vmatpush2.msra.mxu0 0.0
    %272 = vmatprep.subr.mxu0 0.0
    %273 = vmatpush2.msra.mxu0 0.0
    %274 = vmatprep.subr.mxu0 0.0
    %275 = vmatpush2.msra.mxu0 0.0
    %276 = vmatprep.subr.mxu0 0.0
    %277 = vmatpush2.msra.mxu0 0.0
    %278 = vmatprep.subr.mxu0 0.0
    %279 = vmatpush2.msra.mxu0 0.0
    %280 = vmatprep.subr.mxu0 0.0
    %281 = vmatpush2.msra.mxu0 0.0
    %282 = vmatprep.subr.mxu0 0.0
    %283 = vmatpush2.msra.mxu0 0.0
    %284 = vmatprep.subr.mxu0 0.0
    %285 = vmatpush2.msra.mxu0 0.0
    %286 = vmatprep.mubr.f32.mxu0 0.0
    %287 = vmatmul.mubr.f32.gmra.mxu0 %v220
    %v288 = vpop.f32.mrf.mxu0
    %v289 = vadd.f32 %v216, %v288
    %v290 = vpop.f32.mrf.mxu0
    %291 = vdwg.mxu0
    %vm292 = vcmask 130048
    %293 = vst.msk [vmem:[#allocation2] sm:$0xff] %vm292, %v289
    // Predicated region
    $region30: #{tpu_custom_call.1} parent=1 // pred_check
      _
    $region31: #{tpu_custom_call.1} parent=1 // pred_check_branch
      %295 = sbr.rel (0) target = $region33
    $region32: #{tpu_custom_call.1} parent=1 // pred_region
      %s297 = ssub.s32 128, 32
      %298 = vsyncadd [#allocation3], %s297
      %s299 = sshll.u32 [#allocation2], 4
      %s300 = int_to_ptr.vmem [resolvable:$true] %s299
      %305 = dma.vmem_to_hbm [thread:$0]  %s300, 32, %s7, [#allocation3], 32, 32, 2
    $region33: #{tpu_custom_call.1} parent=1 // pred_fallthru
      _
    // Predicated region
    $region34: #{tpu_custom_call.1} parent=1 // pred_check
      _
    $region35: #{tpu_custom_call.1} parent=1 // pred_check_branch
      %307 = sbr.rel (0) target = $region37
    $region36: #{tpu_custom_call.1} parent=1 // pred_region
      %308 = dma.done [#allocation3], 128
    $region37: #{tpu_custom_call.1} parent=1 // pred_fallthru
      _
    %309 = vsyncpa [#allocation3], 1

</llo_original>
